<compile_context>
chip_gen: v5e
topology: v5e:2x2
jax: 0.10.0
libtpu: 0.0.40
codegen_flags: <defaults>
</compile_context>

<pallas_src>
import functools

import jax
import jax.numpy as jnp
from jax.experimental import pallas as pl
from jax.experimental.pallas import tpu as pltpu

_LANE = 128
_SUBLANE = 8

# Streamed-x per-block byte budget for the two-pass fallback.
_X_BLOCK_BYTES = 4 * 1024 * 1024
# Max per-batch (C, HW) slab that the fused single-pass path will hold in VMEM
# (double-buffered in + out => ~4x this in buffers).
_FUSED_SLAB_BYTES = 4 * 1024 * 1024
# Explicit scoped-VMEM limits (safe on v5e/v6e 128 MiB and v7x 64 MiB physical).
_STREAM_VMEM_LIMIT = 32 * 1024 * 1024
_FUSED_VMEM_LIMIT = 48 * 1024 * 1024
# Cap on row tiles in the streaming passes: a (row_tile, 1) gate / pooled-sum
# block pads its minor dim to 128 lanes, so bound the padded buffer size.
_MAX_ROW_TILE = 512


def _stream_tile(n, align, cap):
    """Block extent along one dim: the full dim if it fits the element cap
    (always legal regardless of alignment), else the largest multiple of
    `align` <= cap (at least `align`). Grids then use pl.cdiv(n, tile) and the
    partial tail block is handled (masked where it feeds a reduction)."""
    if n <= cap:
        return n
    return max(align, (cap // align) * align)


# ----------------------------------------------------------------------------
# Fused single-pass kernel: pool -> MLP -> sigmoid -> scale, one batch element
# per grid step, whole (C, HW) slab resident.
# ----------------------------------------------------------------------------
def _se_fused_kernel(x_ref, w1t_ref, w2_ref, o_ref, *, inv_hw):
    """x_ref/o_ref: (1, C, HW); w1t_ref: (C, hidden)=fc1.weight.T; w2_ref: (C, hidden)=fc2.weight."""
    x = x_ref[0]                                                        # (C, HW)
    # Global average pool (f32 accumulation).
    y = jnp.sum(x.astype(jnp.float32), axis=-1, keepdims=True) * inv_hw  # (C, 1)
    # Excitation MLP on the VPU/XLU (tiny; no MXU needed).
    h = jnp.maximum(jnp.sum(y * w1t_ref[...], axis=0, keepdims=True), 0.0)  # (1, hidden)
    s = jnp.sum(h * w2_ref[...], axis=-1, keepdims=True)                    # (C, 1)
    gate = jax.nn.sigmoid(s).astype(x.dtype)
    o_ref[0] = x * gate


def _se_fused(x, w1, w2):
    B, C, H, W = x.shape
    hidden = w1.shape[0]
    HW = H * W
    x3 = x.reshape(B, C, HW)                                   # free view of NCHW

    out = pl.pallas_call(
        functools.partial(_se_fused_kernel, inv_hw=1.0 / float(HW)),
        out_shape=jax.ShapeDtypeStruct((B, C, HW), x.dtype),
        grid_spec=pltpu.PrefetchScalarGridSpec(
            num_scalar_prefetch=0,
            grid=(B,),
            in_specs=[
                pl.BlockSpec((1, C, HW), lambda b: (b, 0, 0)),
                pl.BlockSpec((C, hidden), lambda b: (0, 0)),
                pl.BlockSpec((C, hidden), lambda b: (0, 0)),
            ],
            out_specs=pl.BlockSpec((1, C, HW), lambda b: (b, 0, 0)),
        ),
        compiler_params=pltpu.CompilerParams(
            dimension_semantics=("parallel",),
            vmem_limit_bytes=_FUSED_VMEM_LIMIT),
    )(x3, w1.T, w2)
    return out.reshape(B, C, H, W)


# ----------------------------------------------------------------------------
# Two-pass streaming fallback (large feature maps).
# ----------------------------------------------------------------------------
def _pool_kernel(x_ref, sum_ref, *, hw, hw_tile, need_mask):
    """Per-row (= per (b, c)) partial sums over HW tiles.

    x_ref  : (row_tile, hw_tile) block of x viewed as (B*C, HW)
    sum_ref: (row_tile, 1) f32 output block, resident across the HW grid axis
    """
    t = pl.program_id(1)

    @pl.when(t == 0)
    def _():
        sum_ref[...] = jnp.zeros_like(sum_ref)

    xv = x_ref[...].astype(jnp.float32)
    if need_mask:
        # Tail tile of a non-tile-divisible HW holds stale VMEM data: zero it
        # before it feeds the reduction.
        col = jax.lax.broadcasted_iota(jnp.int32, xv.shape, 1)
        xv = jnp.where(col < (hw - t * hw_tile), xv, 0.0)
    sum_ref[...] += jnp.sum(xv, axis=-1, keepdims=True)


def _se_scale_kernel(x_ref, gate_ref, o_ref):
    """Pure streaming scale: o = x * gate.  x/o: (row_tile, hw_tile); gate: (row_tile, 1)."""
    o_ref[...] = x_ref[...] * gate_ref[...].astype(x_ref.dtype)


def _se_two_pass(x, w1, w2, x_block_bytes):
    B, C, H, W = x.shape
    HW = H * W
    rows = B * C
    itemsize = jnp.dtype(x.dtype).itemsize
    xf = x.reshape(rows, HW)                                   # free view of NCHW

    hw_tile = _stream_tile(HW, _LANE, max(_LANE, x_block_bytes // (_SUBLANE * itemsize)))
    row_cap = min(_MAX_ROW_TILE, max(_SUBLANE, x_block_bytes // (hw_tile * itemsize)))
    row_tile = _stream_tile(rows, _SUBLANE, row_cap)
    n_row = pl.cdiv(rows, row_tile)
    n_hw = pl.cdiv(HW, hw_tile)

    # ---- pass 1: per-(b, c) pooled sums (row axis parallel -> both TCs busy) --
    sums = pl.pallas_call(
        functools.partial(_pool_kernel, hw=HW, hw_tile=hw_tile,
                          need_mask=(HW % hw_tile != 0)),
        out_shape=jax.ShapeDtypeStruct((rows, 1), jnp.float32),
        grid_spec=pltpu.PrefetchScalarGridSpec(
            num_scalar_prefetch=0,
            grid=(n_row, n_hw),
            in_specs=[pl.BlockSpec((row_tile, hw_tile), lambda r, t: (r, t))],
            out_specs=pl.BlockSpec((row_tile, 1), lambda r, t: (r, 0)),
        ),
        compiler_params=pltpu.CompilerParams(
            dimension_semantics=("parallel", "arbitrary"),
            vmem_limit_bytes=_STREAM_VMEM_LIMIT),
    )(xf)

    # ---- tiny excitation MLP in plain JAX (two < C*hidden MAC matmuls) ------
    # TODO(synk): negligible vs the HBM-bound passes; kept outside Pallas on the
    # fallback path (the fused path computes it in-kernel).
    y = sums.reshape(B, C) * (1.0 / float(HW))
    h = jnp.maximum(y @ w1.T, 0.0)
    gate = jax.nn.sigmoid(h @ w2.T).astype(jnp.float32)        # (B, C)
    gate_flat = gate.reshape(rows, 1)

    # ---- pass 2: streaming scale x * gate ------------------------------------
    # Note: no input_output_aliases here — if x is still live (skip/residual),
    # XLA would insert a full defensive copy, costing an extra |x| of traffic.
    out = pl.pallas_call(
        _se_scale_kernel,
        out_shape=jax.ShapeDtypeStruct((rows, HW), x.dtype),
        grid_spec=pltpu.PrefetchScalarGridSpec(
            num_scalar_prefetch=0,
            grid=(n_row, n_hw),
            in_specs=[
                pl.BlockSpec((row_tile, hw_tile), lambda r, t: (r, t)),
                pl.BlockSpec((row_tile, 1), lambda r, t: (r, 0)),
            ],
            out_specs=pl.BlockSpec((row_tile, hw_tile), lambda r, t: (r, t)),
        ),
        compiler_params=pltpu.CompilerParams(
            dimension_semantics=("parallel", "parallel"),
            vmem_limit_bytes=_STREAM_VMEM_LIMIT),
    )(xf, gate_flat)
    return out.reshape(B, C, H, W)


# ----------------------------------------------------------------------------
# Public entry point.
# ----------------------------------------------------------------------------
def se_block(x, w1, w2, *, force_two_pass=False, x_block_bytes=_X_BLOCK_BYTES):
    """SEBlock forward.

    x : (B, C, H, W) NCHW activations.
    w1: (hidden, C)  — PyTorch fc1.weight of nn.Linear(C, hidden, bias=False).
    w2: (C, hidden)  — PyTorch fc2.weight of nn.Linear(hidden, C, bias=False).
    """
    B, C, H, W = x.shape
    hidden = w1.shape[0]
    assert w1.shape == (hidden, C) and w2.shape == (C, hidden)
    slab_bytes = C * H * W * jnp.dtype(x.dtype).itemsize

    if (not force_two_pass) and slab_bytes <= _FUSED_SLAB_BYTES:
        return _se_fused(x, w1, w2)          # 2x|x| HBM traffic, single launch
    return _se_two_pass(x, w1, w2, x_block_bytes)  # 3x|x| streaming fallback


def se_block_reference(x, w1, w2):
    """Pure-JAX reference matching the PyTorch SEBlock semantics."""
    y = jnp.mean(x, axis=(2, 3))                   # AdaptiveAvgPool2d(1)
    y = jnp.maximum(y @ w1.T, 0.0)                 # Linear(C, C//r, bias=False) + ReLU
    y = jax.nn.sigmoid(y @ w2.T)                   # Linear(C//r, C, bias=False) + Sigmoid
    return x * y[:, :, None, None]                 # x * y.expand_as(x)


if __name__ == "__main__":
    B, C, H, W = 2, 64, 16, 16
    reduction = 16
    hidden = C // reduction

    key = jax.random.PRNGKey(0)
    kx, k1, k2 = jax.random.split(key, 3)

    x = jax.random.normal(kx, (B, C, H, W), dtype=jnp.float32)
    # PyTorch nn.Linear weight layouts.
    w1 = jax.random.normal(k1, (hidden, C), dtype=jnp.float32) * (1.0 / jnp.sqrt(C))
    w2 = jax.random.normal(k2, (C, hidden), dtype=jnp.float32) * (1.0 / jnp.sqrt(hidden))

    # --- fused single-pass path (per-batch slab fits VMEM) -------------------
    ref = se_block_reference(x, w1, w2)
    out = jax.block_until_ready(jax.jit(se_block)(x, w1, w2))
    assert out.shape == x.shape
    assert jnp.allclose(out, ref, atol=1e-5, rtol=1e-5), "fused path mismatch"

    # --- two-pass streaming fallback, with a non-128-divisible HW (=400) and a
    # tiny tile budget so the masked-tail / partial-block paths are exercised --
    x2 = jax.random.normal(kx, (B, C, 20, 20), dtype=jnp.float32)
    ref2 = se_block_reference(x2, w1, w2)
    two_pass = jax.jit(functools.partial(se_block, force_two_pass=True,
                                         x_block_bytes=8 * 1024))
    out2 = jax.block_until_ready(two_pass(x2, w1, w2))
    assert out2.shape == x2.shape
    assert jnp.allclose(out2, ref2, atol=1e-5, rtol=1e-5), "two-pass path mismatch"

    print("KERNEL_OK")
</pallas_src>

<mosaic_0001>
module attributes {stable_mosaic.version = 11 : i64} {
  func.func @_se_fused_kernel(%arg0: i32, %arg1: memref<1x64x256xf32, #tpu.memory_space<vmem>>, %arg2: memref<64x4xf32, #tpu.memory_space<vmem>>, %arg3: memref<64x4xf32, #tpu.memory_space<vmem>>, %arg4: memref<1x64x256xf32, #tpu.memory_space<vmem>>) attributes {dimension_semantics = [#tpu.dimension_semantics<parallel>], iteration_bounds = array<i64: 2>, scalar_prefetch = 0 : i64, scratch_operands = 0 : i64, tpu.core_type = #tpu.core_type<tc>, window_params = [{transform_indices = @transform_0, window_bounds = array<i64: 1, 64, 256>}, {pipeline_mode = #tpu.pipeline_mode<synchronous>, transform_indices = @transform_1, window_bounds = array<i64: 64, 4>}, {pipeline_mode = #tpu.pipeline_mode<synchronous>, transform_indices = @transform_2, window_bounds = array<i64: 64, 4>}, {transform_indices = @transform_3, window_bounds = array<i64: 1, 64, 256>}]} {
    %c0 = arith.constant 0 : index
    %c0_0 = arith.constant 0 : index
    %c0_1 = arith.constant 0 : index
    %0 = vector.load %arg1[%c0, %c0_0, %c0_1] : memref<1x64x256xf32, #tpu.memory_space<vmem>>, vector<1x64x256xf32>
    %1 = vector.shape_cast %0 : vector<1x64x256xf32> to vector<64x256xf32>
    %cst = arith.constant dense<0.000000e+00> : vector<64xf32>
    %2 = vector.multi_reduction <add>, %1, %cst [1] : vector<64x256xf32> to vector<64xf32>
    %3 = vector.shape_cast %2 : vector<64xf32> to vector<64x1xf32>
    %cst_2 = arith.constant 3.906250e-03 : f32
    %4 = vector.broadcast %cst_2 : f32 to vector<64x1xf32>
    %5 = arith.mulf %3, %4 : vector<64x1xf32>
    %c0_3 = arith.constant 0 : index
    %c0_4 = arith.constant 0 : index
    %6 = vector.load %arg2[%c0_3, %c0_4] : memref<64x4xf32, #tpu.memory_space<vmem>>, vector<64x4xf32>
    %7 = vector.broadcast %5 : vector<64x1xf32> to vector<64x4xf32>
    %8 = arith.mulf %7, %6 : vector<64x4xf32>
    %cst_5 = arith.constant dense<0.000000e+00> : vector<4xf32>
    %9 = vector.multi_reduction <add>, %8, %cst_5 [0] : vector<64x4xf32> to vector<4xf32>
    %10 = vector.shape_cast %9 : vector<4xf32> to vector<1x4xf32>
    %cst_6 = arith.constant 0.000000e+00 : f32
    %11 = vector.broadcast %cst_6 : f32 to vector<1x4xf32>
    %12 = arith.maximumf %10, %11 : vector<1x4xf32>
    %c0_7 = arith.constant 0 : index
    %c0_8 = arith.constant 0 : index
    %13 = vector.load %arg3[%c0_7, %c0_8] : memref<64x4xf32, #tpu.memory_space<vmem>>, vector<64x4xf32>
    %14 = vector.broadcast %12 : vector<1x4xf32> to vector<64x4xf32>
    %15 = arith.mulf %14, %13 : vector<64x4xf32>
    %cst_9 = arith.constant dense<0.000000e+00> : vector<64xf32>
    %16 = vector.multi_reduction <add>, %15, %cst_9 [1] : vector<64x4xf32> to vector<64xf32>
    %17 = vector.shape_cast %16 : vector<64xf32> to vector<64x1xf32>
    %18 = arith.negf %17 : vector<64x1xf32>
    %19 = math.exp %18 : vector<64x1xf32>
    %cst_10 = arith.constant 1.000000e+00 : f32
    %20 = vector.broadcast %cst_10 : f32 to vector<64x1xf32>
    %21 = arith.addf %20, %19 : vector<64x1xf32>
    %22 = arith.divf %20, %21 : vector<64x1xf32>
    %23 = vector.broadcast %22 : vector<64x1xf32> to vector<64x256xf32>
    %24 = arith.mulf %1, %23 : vector<64x256xf32>
    %c0_11 = arith.constant 0 : index
    %c0_12 = arith.constant 0 : index
    %c0_13 = arith.constant 0 : index
    %25 = vector.load %arg4[%c0_11, %c0_12, %c0_13] : memref<1x64x256xf32, #tpu.memory_space<vmem>>, vector<1x64x256xf32>
    %26 = vector.shape_cast %25 : vector<1x64x256xf32> to vector<64x256xf32>
    %27 = vector.shape_cast %24 : vector<64x256xf32> to vector<1x64x256xf32>
    tpu.vector_store %arg4[%c0_11, %c0_12, %c0_13], %27 {strides = array<i32>} : memref<1x64x256xf32, #tpu.memory_space<vmem>>, vector<1x64x256xf32>,
    return
  }
  func.func @transform_0(%arg0: i32) -> (i32, i32, i32) {
    %c0_i32 = arith.constant 0 : i32
    %c0_i32_0 = arith.constant 0 : i32
    %c0_i32_1 = arith.constant 0 : i32
    return %arg0, %c0_i32, %c0_i32_0 : i32, i32, i32
  }
  func.func @transform_1(%arg0: i32) -> (i32, i32) {
    %c0_i32 = arith.constant 0 : i32
    %c0_i32_0 = arith.constant 0 : i32
    %c0_i32_1 = arith.constant 0 : i32
    return %c0_i32, %c0_i32_0 : i32, i32
  }
  func.func @transform_2(%arg0: i32) -> (i32, i32) {
    %c0_i32 = arith.constant 0 : i32
    %c0_i32_0 = arith.constant 0 : i32
    %c0_i32_1 = arith.constant 0 : i32
    return %c0_i32, %c0_i32_0 : i32, i32
  }
  func.func @transform_3(%arg0: i32) -> (i32, i32, i32) {
    %c0_i32 = arith.constant 0 : i32
    %c0_i32_0 = arith.constant 0 : i32
    %c0_i32_1 = arith.constant 0 : i32
    return %arg0, %c0_i32, %c0_i32_0 : i32, i32, i32
  }
}

</mosaic_0001>

<llo_original>
// kernel: se_block.1
$region0: #{se_block.1}
  #allocation0 [shape = 'u32[]', space=smem, size = 0x4, offset = 0x4, fixed_abs, tag = 'smem constant byte address 0x4 - core index']
  #allocation1 [shape = 'u32[72,128]{1,0:T(1,128)}', space=vmem, size = 0x9000, scoped, tag = 'internal scratch']
  %s0 = inlined_call_operand.vmem [shape: f32[2,64,256], index: 0, kind: input, shape index: {}]
  %s1 = inlined_call_operand.vmem [shape: f32[64,4], index: 1, kind: input, shape index: {}]
  %s2 = inlined_call_operand.vmem [shape: f32[64,4], index: 2, kind: input, shape index: {}]
  %s3 = inlined_call_operand.vmem [shape: f32[2,64,256], index: 3, kind: output, shape index: {}]
  %s4 = sld [smem:[#allocation0]]
  $region45: #{se_block.1} parent=0
    _
  %s6 = ssub.s32 1, %s4
  %s7 = scalar_select 0, %s6, %s4
  loop: start=0, step=1, limit=4
  $region2: #{se_block.1} parent=0 // loop_pre_header
    _
  $region3: #{se_block.1} parent=0 // loop_header
    %s9 = sphi 0, %s13
    %p10 = scmp.ge.s32.totalorder %s9, 4
    %s19 = sphi 0, %s21
    %s22 = sphi 0, %s19
    %s23 = sphi 0, %s22
    %s39 = sphi 0, %s23
    %s43 = sphi 0, %s43
    %s45 = sphi 0, %s43
    %s46 = sphi 0, %s45
    %s60 = sphi 0, %s46
    %s64 = sphi 0, %s64
    %s66 = sphi 0, %s64
    %s67 = sphi 0, %s66
    %s81 = sphi 0, %s67
    %s87 = sphi 0, %s89
    %s90 = sphi 0, %s87
    %s91 = sphi 0, %s90
    %s107 = sphi 0, %s91
  $region4: #{se_block.1} parent=0 // loop_header_branch
    %12 = sbr.rel (%p10) target = $region8
  $region5: #{se_block.1} parent=0 // loop_body
    %s14 = ssub.s32 %s9, 1
    %s15 = ssub.s32 %s9, 2
    %s16 = sadd.s32 %s9, 1
    %s17 = ssub.s32 %s9, %s16
    %p18 = scmp.eq.s32.totalorder %s17, 0
    %s20 = sadd.s32 %s19, 1
    %s21 = scalar_select %p18, %s19, %s20
    %p24 = pneg %p18
    %p25 = scmp.eq.s32.totalorder %s9, 1
    %p26 = por %p24, %p25
    %p27 = scmp.ne.s32.totalorder %s19, %s22
    %p28 = scmp.eq.s32.totalorder %s9, 0
    %p29 = por %p27, %p28
    %p30 = scmp.ne.s32.totalorder %s19, %s22
    %p31 = scmp.eq.s32.totalorder %s14, 1
    %p32 = por %p30, %p31
    %p33 = scmp.ne.s32.totalorder %s22, %s23
    %p34 = scmp.eq.s32.totalorder %s14, 0
    %p35 = por %p33, %p34
    %p36 = scmp.ne.s32.totalorder %s22, %s23
    %p37 = scmp.eq.s32.totalorder %s15, 1
    %p38 = por %p36, %p37
    %p40 = scmp.ne.s32.totalorder %s23, %s39
    %p41 = scmp.eq.s32.totalorder %s15, 0
    %p42 = por %p40, %p41
    %s44 = sadd.s32 %s43, 1
    %p47 = scmp.eq.s32.totalorder %s9, 1
    %p48 = scmp.ne.s32.totalorder %s43, %s45
    %p49 = scmp.eq.s32.totalorder %s9, 0
    %p50 = por %p48, %p49
    %p51 = scmp.ne.s32.totalorder %s43, %s45
    %p52 = scmp.eq.s32.totalorder %s14, 1
    %p53 = por %p51, %p52
    %p54 = scmp.ne.s32.totalorder %s45, %s46
    %p55 = scmp.eq.s32.totalorder %s14, 0
    %p56 = por %p54, %p55
    %p57 = scmp.ne.s32.totalorder %s45, %s46
    %p58 = scmp.eq.s32.totalorder %s15, 1
    %p59 = por %p57, %p58
    %p61 = scmp.ne.s32.totalorder %s46, %s60
    %p62 = scmp.eq.s32.totalorder %s15, 0
    %p63 = por %p61, %p62
    %s65 = sadd.s32 %s64, 1
    %p68 = scmp.eq.s32.totalorder %s9, 1
    %p69 = scmp.ne.s32.totalorder %s64, %s66
    %p70 = scmp.eq.s32.totalorder %s9, 0
    %p71 = por %p69, %p70
    %p72 = scmp.ne.s32.totalorder %s64, %s66
    %p73 = scmp.eq.s32.totalorder %s14, 1
    %p74 = por %p72, %p73
    %p75 = scmp.ne.s32.totalorder %s66, %s67
    %p76 = scmp.eq.s32.totalorder %s14, 0
    %p77 = por %p75, %p76
    %p78 = scmp.ne.s32.totalorder %s66, %s67
    %p79 = scmp.eq.s32.totalorder %s15, 1
    %p80 = por %p78, %p79
    %p82 = scmp.ne.s32.totalorder %s67, %s81
    %p83 = scmp.eq.s32.totalorder %s15, 0
    %p84 = por %p82, %p83
    %s85 = ssub.s32 %s9, %s16
    %p86 = scmp.eq.s32.totalorder %s85, 0
    %s88 = sadd.s32 %s87, 1
    %s89 = scalar_select %p86, %s87, %s88
    %p92 = pneg %p86
    %p93 = scmp.eq.s32.totalorder %s9, 1
    %p94 = por %p92, %p93
    %p95 = scmp.ne.s32.totalorder %s87, %s90
    %p96 = scmp.eq.s32.totalorder %s9, 0
    %p97 = por %p95, %p96
    %p98 = scmp.ne.s32.totalorder %s87, %s90
    %p99 = scmp.eq.s32.totalorder %s14, 1
    %p100 = por %p98, %p99
    %p101 = scmp.ne.s32.totalorder %s90, %s91
    %p102 = scmp.eq.s32.totalorder %s14, 0
    %p103 = por %p101, %p102
    %p104 = scmp.ne.s32.totalorder %s90, %s91
    %p105 = scmp.eq.s32.totalorder %s15, 1
    %p106 = por %p104, %p105
    %p108 = scmp.ne.s32.totalorder %s91, %s107
    %p109 = scmp.eq.s32.totalorder %s15, 0
    %p110 = por %p108, %p109
    %p111 = scmp.le.s32.totalorder 1, %s9
    %p112 = scmp.lt.s32.totalorder %s9, 3
    %p113 = pnand %p111, %p112
    %p114 = pneg %p113
    // Predicated region
    $region9: #{se_block.1} parent=5 // pred_check
      _
    $region10: #{se_block.1} parent=5 // pred_check_branch
      %116 = sbr.rel (%p113) target = $region12
    $region11: #{se_block.1} parent=5 // pred_region
      %s117 = ssub.s32 %s9, 1
      // Predicated region
      $region13: #{se_block.1} parent=11 // pred_check
        %p118 = pneg %p56
      $region14: #{se_block.1} parent=11 // pred_check_branch
        %120 = sbr.rel (%p118) target = $region16
      $region15: #{se_block.1} parent=11 // pred_region
        _
      $region16: #{se_block.1} parent=11 // pred_fallthru
        _
      // Predicated region
      $region17: #{se_block.1} parent=11 // pred_check
        %p121 = pneg %p77
      $region18: #{se_block.1} parent=11 // pred_check_branch
        %123 = sbr.rel (%p121) target = $region20
      $region19: #{se_block.1} parent=11 // pred_region
        _
      $region20: #{se_block.1} parent=11 // pred_fallthru
        _
    $region12: #{se_block.1} parent=5 // pred_fallthru
      _
    %p124 = scmp.lt.s32.totalorder %s9, 2
    // Predicated region
    $region21: #{se_block.1} parent=5 // pred_check
      %p125 = pneg %p124
    $region22: #{se_block.1} parent=5 // pred_check_branch
      %127 = sbr.rel (%p125) target = $region24
    $region23: #{se_block.1} parent=5 // pred_region
      // Predicated region
      $region25: #{se_block.1} parent=23 // pred_check
        %p128 = pneg %p29
      $region26: #{se_block.1} parent=23 // pred_check_branch
        %130 = sbr.rel (%p128) target = $region28
      $region27: #{se_block.1} parent=23 // pred_region
        %p131 = scmp.lt.s32.totalorder %s9, 1
        %s132 = scalar_select %p131, %s9, 1
        %s133 = smul.addr %s132, 16
        %s134 = smul.addr %s133, 8
        %s135 = scalar_lea.vmem %s0, %s134
      $region28: #{se_block.1} parent=23 // pred_fallthru
        _
    $region24: #{se_block.1} parent=5 // pred_fallthru
      _
    %p136 = scmp.le.s32.totalorder 1, %s9
    %p137 = scmp.lt.s32.totalorder %s9, 3
    %p138 = pnand %p136, %p137
    %p139 = pneg %p138
    // Predicated region
    $region29: #{se_block.1} parent=5 // pred_check
      _
    $region30: #{se_block.1} parent=5 // pred_check_branch
      %141 = sbr.rel (%p138) target = $region32
    $region31: #{se_block.1} parent=5 // pred_region
      %s142 = ssub.s32 %s9, 1
      %p143 = scmp.lt.s32.totalorder %s14, 1
      %s144 = scalar_select %p143, %s14, 1
      %s145 = smul.addr %s144, 16
      %s146 = smul.addr %s145, 8
      %s147 = scalar_lea.vmem %s0, %s146
      %p148 = pneg %p35
      %p149 = pneg %p32
      %p150 = pneg %p56
      %p151 = pneg %p53
      %p152 = pneg %p77
      %p153 = pneg %p74
      %p154 = pneg %p103
      %p155 = pneg %p100
      %p156 = scmp.lt.s32.totalorder %s14, 1
      %s157 = scalar_select %p156, %s14, 1
      %s158 = smul.addr %s157, 16
      %s159 = smul.addr %s158, 8
      %s160 = scalar_lea.vmem %s3, %s159
      %p161 = scmp.lt.s32.totalorder %s14, 1
      %s162 = scalar_select %p161, %s14, 1
      %s163 = smul.addr %s162, 16
      %s164 = smul.addr %s163, 8
      %s165 = scalar_lea.vmem %s0, %s164
      %p166 = scmp.lt.s32.totalorder %s14, 1
      %s167 = scalar_select %p166, %s14, 1
      %s168 = smul.addr %s167, 16
      %s169 = smul.addr %s168, 8
      %s170 = scalar_lea.vmem %s3, %s169
      %v171 = vld [vmem:[%s165] sm:$0xff]
      %v172 = vld [vmem:[%s165 + $0x8] sm:$0xff]
      %v173 = vld [vmem:[%s165 + $0x10] sm:$0xff]
      %v174 = vld [vmem:[%s165 + $0x18] sm:$0xff]
      %v175 = vld [vmem:[%s165 + $0x20] sm:$0xff]
      %v176 = vld [vmem:[%s165 + $0x28] sm:$0xff]
      %v177 = vld [vmem:[%s165 + $0x30] sm:$0xff]
      %v178 = vld [vmem:[%s165 + $0x38] sm:$0xff]
      %v179 = vld [vmem:[%s165 + $0x40] sm:$0xff]
      %v180 = vld [vmem:[%s165 + $0x48] sm:$0xff]
      %v181 = vld [vmem:[%s165 + $0x50] sm:$0xff]
      %v182 = vld [vmem:[%s165 + $0x58] sm:$0xff]
      %v183 = vld [vmem:[%s165 + $0x60] sm:$0xff]
      %v184 = vld [vmem:[%s165 + $0x68] sm:$0xff]
      %v185 = vld [vmem:[%s165 + $0x70] sm:$0xff]
      %v186 = vld [vmem:[%s165 + $0x78] sm:$0xff]
      %v187 = vadd.f32 %v171, %v172
      %188 = vadd.xlane.f32.xlu0 %v187
      %v189 = vpop.xlane.xlu0 %188
      %v190 = vadd.f32 %v173, %v174
      %191 = vadd.xlane.f32.xlu0 %v190
      %v192 = vpop.xlane.xlu0 %191
      %v193 = vadd.f32 %v175, %v176
      %194 = vadd.xlane.f32.xlu0 %v193
      %v195 = vpop.xlane.xlu0 %194
      %v196 = vadd.f32 %v177, %v178
      %197 = vadd.xlane.f32.xlu0 %v196
      %v198 = vpop.xlane.xlu0 %197
      %v199 = vadd.f32 %v179, %v180
      %200 = vadd.xlane.f32.xlu0 %v199
      %v201 = vpop.xlane.xlu0 %200
      %v202 = vadd.f32 %v181, %v182
      %203 = vadd.xlane.f32.xlu0 %v202
      %v204 = vpop.xlane.xlu0 %203
      %v205 = vadd.f32 %v183, %v184
      %206 = vadd.xlane.f32.xlu0 %v205
      %v207 = vpop.xlane.xlu0 %206
      %v208 = vadd.f32 %v185, %v186
      %209 = vadd.xlane.f32.xlu0 %v208
      %v210 = vpop.xlane.xlu0 %209
      %v211 = vmul.f32 %v189, 0.00390625
      %v212 = vmul.f32 %v192, 0.00390625
      %v213 = vmul.f32 %v195, 0.00390625
      %v214 = vmul.f32 %v198, 0.00390625
      %v215 = vmul.f32 %v201, 0.00390625
      %v216 = vmul.f32 %v204, 0.00390625
      %v217 = vmul.f32 %v207, 0.00390625
      %v218 = vmul.f32 %v210, 0.00390625
      %v219 = vld [vmem:[%s1] sm:$0xff]
      %v220 = vld [vmem:[%s1 + $0x8] sm:$0xff]
      %v221 = vld [vmem:[%s1 + $0x10] sm:$0xff]
      %v222 = vld [vmem:[%s1 + $0x18] sm:$0xff]
      %v223 = vld [vmem:[%s1 + $0x20] sm:$0xff]
      %v224 = vld [vmem:[%s1 + $0x28] sm:$0xff]
      %v225 = vld [vmem:[%s1 + $0x30] sm:$0xff]
      %v226 = vld [vmem:[%s1 + $0x38] sm:$0xff]
      %v227 = vmul.f32 %v211, %v219
      %v228 = vmul.f32 %v212, %v220
      %v229 = vmul.f32 %v213, %v221
      %v230 = vmul.f32 %v214, %v222
      %v231 = vmul.f32 %v215, %v223
      %v232 = vmul.f32 %v216, %v224
      %v233 = vmul.f32 %v217, %v225
      %v234 = vmul.f32 %v218, %v226
      %vm235 = vcmask 31744
      %v236 = vsel %vm235, %v227, 0.0
      %v237 = vsel %vm235, %v228, 0.0
      %v238 = vadd.f32 %v236, %v237
      %v239 = vsel %vm235, %v229, 0.0
      %v240 = vadd.f32 %v238, %v239
      %v241 = vsel %vm235, %v230, 0.0
      %v242 = vadd.f32 %v240, %v241
      %v243 = vsel %vm235, %v231, 0.0
      %v244 = vadd.f32 %v242, %v243
      %v245 = vsel %vm235, %v232, 0.0
      %v246 = vadd.f32 %v244, %v245
      %v247 = vsel %vm235, %v233, 0.0
      %v248 = vadd.f32 %v246, %v247
      %v249 = vsel %vm235, %v234, 0.0
      %v250 = vadd.f32 %v248, %v249
      %v251 = vrot.slane %v250, 4
      %v252 = vadd.f32 %v250, %v251
      %v253 = vrot.slane %v252, 2
      %v254 = vadd.f32 %v252, %v253
      %v255 = vrot.slane %v254, 1
      %v256 = vadd.f32 %v254, %v255
      %v257 = vmax.f32 %v256, 0.0
      %v258 = vld [vmem:[%s2] sm:$0xff]
      %v259 = vld [vmem:[%s2 + $0x8] sm:$0xff]
      %v260 = vld [vmem:[%s2 + $0x10] sm:$0xff]
      %v261 = vld [vmem:[%s2 + $0x18] sm:$0xff]
      %v262 = vld [vmem:[%s2 + $0x20] sm:$0xff]
      %v263 = vld [vmem:[%s2 + $0x28] sm:$0xff]
      %v264 = vld [vmem:[%s2 + $0x30] sm:$0xff]
      %v265 = vld [vmem:[%s2 + $0x38] sm:$0xff]
      %v266 = vmul.f32 %v257, %v258
      %v267 = vmul.f32 %v257, %v259
      %v268 = vmul.f32 %v257, %v260
      %v269 = vmul.f32 %v257, %v261
      %v270 = vmul.f32 %v257, %v262
      %v271 = vmul.f32 %v257, %v263
      %v272 = vmul.f32 %v257, %v264
      %v273 = vmul.f32 %v257, %v265
      %v274 = vsel %vm235, %v266, 0.0
      %275 = vadd.xlane.f32.xlu0 %v274
      %v276 = vpop.xlane.xlu0 %275
      %v277 = vsel %vm235, %v267, 0.0
      %278 = vadd.xlane.f32.xlu0 %v277
      %v279 = vpop.xlane.xlu0 %278
      %v280 = vsel %vm235, %v268, 0.0
      %281 = vadd.xlane.f32.xlu0 %v280
      %v282 = vpop.xlane.xlu0 %281
      %v283 = vsel %vm235, %v269, 0.0
      %284 = vadd.xlane.f32.xlu0 %v283
      %v285 = vpop.xlane.xlu0 %284
      %v286 = vsel %vm235, %v270, 0.0
      %287 = vadd.xlane.f32.xlu0 %v286
      %v288 = vpop.xlane.xlu0 %287
      %v289 = vsel %vm235, %v271, 0.0
      %290 = vadd.xlane.f32.xlu0 %v289
      %v291 = vpop.xlane.xlu0 %290
      %v292 = vsel %vm235, %v272, 0.0
      %293 = vadd.xlane.f32.xlu0 %v292
      %v294 = vpop.xlane.xlu0 %293
      %v295 = vsel %vm235, %v273, 0.0
      %296 = vadd.xlane.f32.xlu0 %v295
      %v297 = vpop.xlane.xlu0 %296
      %v298 = vxor.u32 %v276, 2147483648
      %v299 = vxor.u32 %v279, 2147483648
      %v300 = vxor.u32 %v282, 2147483648
      %v301 = vxor.u32 %v285, 2147483648
      %v302 = vxor.u32 %v288, 2147483648
      %v303 = vxor.u32 %v291, 2147483648
      %v304 = vxor.u32 %v294, 2147483648
      %v305 = vxor.u32 %v297, 2147483648
      %v306 = vmul.f32 %v298, 1.442695
      %v307 = vpow.pop %v306
      %v308 = vmul.f32 %v299, 1.442695
      %v309 = vpow.pop %v308
      %v310 = vmul.f32 %v300, 1.442695
      %v311 = vpow.pop %v310
      %v312 = vmul.f32 %v301, 1.442695
      %v313 = vpow.pop %v312
      %v314 = vmul.f32 %v302, 1.442695
      %v315 = vpow.pop %v314
      %v316 = vmul.f32 %v303, 1.442695
      %v317 = vpow.pop %v316
      %v318 = vmul.f32 %v304, 1.442695
      %v319 = vpow.pop %v318
      %v320 = vmul.f32 %v305, 1.442695
      %v321 = vpow.pop %v320
      %v322 = vadd.f32 %v307, 1.0
      %v323 = vadd.f32 %v309, 1.0
      %v324 = vadd.f32 %v311, 1.0
      %v325 = vadd.f32 %v313, 1.0
      %v326 = vadd.f32 %v315, 1.0
      %v327 = vadd.f32 %v317, 1.0
      %v328 = vadd.f32 %v319, 1.0
      %v329 = vadd.f32 %v321, 1.0
      %v330 = vrcp.pop %v322
      %v331 = vmul.f32 %v322, %v330
      %v332 = vsub.f32 1.0, %v331
      %v333 = vmul.f32 %v330, %v332
      %v334 = vadd.f32 %v330, %v333
      %vm335 = vweird.f32 %v322
      %vm336 = vweird.f32 %v330
      %vm337 = vmor %vm335, %vm336
      %v338 = vsel %vm337, %v330, %v334
      %v339 = vand.u32 2147483647, %v322
      %vm340 = vcmp.eq.f32.partialorder %v339, 8.507059e+37
      %v341 = vand.u32 %v322, 2147483648
      %v342 = vor.u32 1.1754944e-38, %v341
      %v343 = vsel %vm340, %v342, %v338
      %v344 = vmul.f32 1.0, %v343
      %v345 = vrcp.pop %v323
      %v346 = vmul.f32 %v323, %v345
      %v347 = vsub.f32 1.0, %v346
      %v348 = vmul.f32 %v345, %v347
      %v349 = vadd.f32 %v345, %v348
      %vm350 = vweird.f32 %v323
      %vm351 = vweird.f32 %v345
      %vm352 = vmor %vm350, %vm351
      %v353 = vsel %vm352, %v345, %v349
      %v354 = vand.u32 2147483647, %v323
      %vm355 = vcmp.eq.f32.partialorder %v354, 8.507059e+37
      %v356 = vand.u32 %v323, 2147483648
      %v357 = vor.u32 1.1754944e-38, %v356
      %v358 = vsel %vm355, %v357, %v353
      %v359 = vmul.f32 1.0, %v358
      %v360 = vrcp.pop %v324
      %v361 = vmul.f32 %v324, %v360
      %v362 = vsub.f32 1.0, %v361
      %v363 = vmul.f32 %v360, %v362
      %v364 = vadd.f32 %v360, %v363
      %vm365 = vweird.f32 %v324
      %vm366 = vweird.f32 %v360
      %vm367 = vmor %vm365, %vm366
      %v368 = vsel %vm367, %v360, %v364
      %v369 = vand.u32 2147483647, %v324
      %vm370 = vcmp.eq.f32.partialorder %v369, 8.507059e+37
      %v371 = vand.u32 %v324, 2147483648
      %v372 = vor.u32 1.1754944e-38, %v371
      %v373 = vsel %vm370, %v372, %v368
      %v374 = vmul.f32 1.0, %v373
      %v375 = vrcp.pop %v325
      %v376 = vmul.f32 %v325, %v375
      %v377 = vsub.f32 1.0, %v376
      %v378 = vmul.f32 %v375, %v377
      %v379 = vadd.f32 %v375, %v378
      %vm380 = vweird.f32 %v325
      %vm381 = vweird.f32 %v375
      %vm382 = vmor %vm380, %vm381
      %v383 = vsel %vm382, %v375, %v379
      %v384 = vand.u32 2147483647, %v325
      %vm385 = vcmp.eq.f32.partialorder %v384, 8.507059e+37
      %v386 = vand.u32 %v325, 2147483648
      %v387 = vor.u32 1.1754944e-38, %v386
      %v388 = vsel %vm385, %v387, %v383
      %v389 = vmul.f32 1.0, %v388
      %v390 = vrcp.pop %v326
      %v391 = vmul.f32 %v326, %v390
      %v392 = vsub.f32 1.0, %v391
      %v393 = vmul.f32 %v390, %v392
      %v394 = vadd.f32 %v390, %v393
      %vm395 = vweird.f32 %v326
      %vm396 = vweird.f32 %v390
      %vm397 = vmor %vm395, %vm396
      %v398 = vsel %vm397, %v390, %v394
      %v399 = vand.u32 2147483647, %v326
      %vm400 = vcmp.eq.f32.partialorder %v399, 8.507059e+37
      %v401 = vand.u32 %v326, 2147483648
      %v402 = vor.u32 1.1754944e-38, %v401
      %v403 = vsel %vm400, %v402, %v398
      %v404 = vmul.f32 1.0, %v403
      %v405 = vrcp.pop %v327
      %v406 = vmul.f32 %v327, %v405
      %v407 = vsub.f32 1.0, %v406
      %v408 = vmul.f32 %v405, %v407
      %v409 = vadd.f32 %v405, %v408
      %vm410 = vweird.f32 %v327
      %vm411 = vweird.f32 %v405
      %vm412 = vmor %vm410, %vm411
      %v413 = vsel %vm412, %v405, %v409
      %v414 = vand.u32 2147483647, %v327
      %vm415 = vcmp.eq.f32.partialorder %v414, 8.507059e+37
      %v416 = vand.u32 %v327, 2147483648
      %v417 = vor.u32 1.1754944e-38, %v416
      %v418 = vsel %vm415, %v417, %v413
      %v419 = vmul.f32 1.0, %v418
      %v420 = vrcp.pop %v328
      %v421 = vmul.f32 %v328, %v420
      %v422 = vsub.f32 1.0, %v421
      %v423 = vmul.f32 %v420, %v422
      %v424 = vadd.f32 %v420, %v423
      %vm425 = vweird.f32 %v328
      %vm426 = vweird.f32 %v420
      %vm427 = vmor %vm425, %vm426
      %v428 = vsel %vm427, %v420, %v424
      %v429 = vand.u32 2147483647, %v328
      %vm430 = vcmp.eq.f32.partialorder %v429, 8.507059e+37
      %v431 = vand.u32 %v328, 2147483648
      %v432 = vor.u32 1.1754944e-38, %v431
      %v433 = vsel %vm430, %v432, %v428
      %v434 = vmul.f32 1.0, %v433
      %v435 = vrcp.pop %v329
      %v436 = vmul.f32 %v329, %v435
      %v437 = vsub.f32 1.0, %v436
      %v438 = vmul.f32 %v435, %v437
      %v439 = vadd.f32 %v435, %v438
      %vm440 = vweird.f32 %v329
      %vm441 = vweird.f32 %v435
      %vm442 = vmor %vm440, %vm441
      %v443 = vsel %vm442, %v435, %v439
      %v444 = vand.u32 2147483647, %v329
      %vm445 = vcmp.eq.f32.partialorder %v444, 8.507059e+37
      %v446 = vand.u32 %v329, 2147483648
      %v447 = vor.u32 1.1754944e-38, %v446
      %v448 = vsel %vm445, %v447, %v443
      %v449 = vmul.f32 1.0, %v448
      %v450 = vmul.f32 %v171, %v344
      %v451 = vmul.f32 %v172, %v344
      %v452 = vmul.f32 %v173, %v359
      %v453 = vmul.f32 %v174, %v359
      %v454 = vmul.f32 %v175, %v374
      %v455 = vmul.f32 %v176, %v374
      %v456 = vmul.f32 %v177, %v389
      %v457 = vmul.f32 %v178, %v389
      %v458 = vmul.f32 %v179, %v404
      %v459 = vmul.f32 %v180, %v404
      %v460 = vmul.f32 %v181, %v419
      %v461 = vmul.f32 %v182, %v419
      %v462 = vmul.f32 %v183, %v434
      %v463 = vmul.f32 %v184, %v434
      %v464 = vmul.f32 %v185, %v449
      %v465 = vmul.f32 %v186, %v449
      %466 = vst [vmem:[%s170] sm:$0xff] %v450
      %467 = vst [vmem:[%s170 + $0x8] sm:$0xff] %v451
      %468 = vst [vmem:[%s170 + $0x10] sm:$0xff] %v452
      %469 = vst [vmem:[%s170 + $0x18] sm:$0xff] %v453
      %470 = vst [vmem:[%s170 + $0x20] sm:$0xff] %v454
      %471 = vst [vmem:[%s170 + $0x28] sm:$0xff] %v455
      %472 = vst [vmem:[%s170 + $0x30] sm:$0xff] %v456
      %473 = vst [vmem:[%s170 + $0x38] sm:$0xff] %v457
      %474 = vst [vmem:[%s170 + $0x40] sm:$0xff] %v458
      %475 = vst [vmem:[%s170 + $0x48] sm:$0xff] %v459
      %476 = vst [vmem:[%s170 + $0x50] sm:$0xff] %v460
      %477 = vst [vmem:[%s170 + $0x58] sm:$0xff] %v461
      %478 = vst [vmem:[%s170 + $0x60] sm:$0xff] %v462
      %479 = vst [vmem:[%s170 + $0x68] sm:$0xff] %v463
      %480 = vst [vmem:[%s170 + $0x70] sm:$0xff] %v464
      %481 = vst [vmem:[%s170 + $0x78] sm:$0xff] %v465
      %p482 = scmp.lt.s32.totalorder %s14, 1
      %s483 = scalar_select %p482, %s14, 1
      %s484 = smul.addr %s483, 16
      %s485 = smul.addr %s484, 8
      %s486 = scalar_lea.vmem %s3, %s485
      // Predicated region
      $region33: #{se_block.1} parent=31 // pred_check
        %p487 = pneg %p100
      $region34: #{se_block.1} parent=31 // pred_check_branch
        %489 = sbr.rel (%p487) target = $region36
      $region35: #{se_block.1} parent=31 // pred_region
        _
      $region36: #{se_block.1} parent=31 // pred_fallthru
        _
    $region32: #{se_block.1} parent=5 // pred_fallthru
      _
    %p490 = scmp.le.s32.totalorder 2, %s9
    // Predicated region
    $region37: #{se_block.1} parent=5 // pred_check
      %p491 = pneg %p490
    $region38: #{se_block.1} parent=5 // pred_check_branch
      %493 = sbr.rel (%p491) target = $region40
    $region39: #{se_block.1} parent=5 // pred_region
      %s494 = ssub.s32 %s9, 2
      // Predicated region
      $region41: #{se_block.1} parent=39 // pred_check
        %p495 = pneg %p106
      $region42: #{se_block.1} parent=39 // pred_check_branch
        %497 = sbr.rel (%p495) target = $region44
      $region43: #{se_block.1} parent=39 // pred_region
        %p498 = scmp.lt.s32.totalorder %s15, 1
        %s499 = scalar_select %p498, %s15, 1
        %s500 = smul.addr %s499, 16
        %s501 = smul.addr %s500, 8
        %s502 = scalar_lea.vmem %s3, %s501
      $region44: #{se_block.1} parent=39 // pred_fallthru
        _
    $region40: #{se_block.1} parent=5 // pred_fallthru
      _
  $region6: #{se_block.1} parent=0 // loop_footer
    %s13 = sadd.s32 1, %s9
  $region7: #{se_block.1} parent=0 // loop_footer_branch
    %8 = sbr.rel target = $region3
  $region8: #{se_block.1} parent=0 // loop_exit
    _

</llo_original>
